<compile_context>
chip_gen: v5e
topology: v5e:2x2
jax: 0.10.0
libtpu: 0.0.40
codegen_flags: <defaults>
</compile_context>

<pallas_src>
import functools

import jax
import jax.numpy as jnp
from jax import lax
from jax.experimental import pallas as pl
from jax.experimental.pallas import tpu as pltpu

_LANE = 128
_SUB = 8


def _round_up(x, m):
    return (x + m - 1) // m * m


def _vmem_budget_bytes():
    """Per-TensorCore VMEM limit with headroom (v5e/v6e: 128 MiB phys, v7x: 64 MiB)."""
    try:
        cap = int(pltpu.get_tpu_info().vmem_capacity_bytes)
    except Exception:  # pragma: no cover - conservative (v7x-sized) fallback
        cap = 64 * 1024 * 1024
    return min(int(cap * 0.85), cap - 8 * 1024 * 1024)


def _pick_row_tile(total_rows, bytes_per_row, fixed_bytes, budget_bytes, need_split):
    """Largest 8-aligned row tile whose working set fits the VMEM budget (big tiles win)."""
    avail = budget_bytes - fixed_bytes
    max_rows = max(_SUB, (avail // max(bytes_per_row, 1)) // _SUB * _SUB)
    tr = min(_round_up(total_rows, _SUB), max_rows)
    if need_split:
        # Keep >= 2 grid steps on a parallel axis so both v7x TensorCores get work.
        half = _round_up((total_rows + 1) // 2, _SUB)
        if half < _round_up(total_rows, _SUB):
            tr = min(tr, half)
    return max(int(tr), _SUB)


# ---------------------------------------------------------------------------
# Kernels
# ---------------------------------------------------------------------------
def _gemm_bn_relu_kernel(x_ref, w_ref, b_ref, o_ref):
    # x_ref: (tr, K_pad) im2col slab tile   w_ref: (K_pad, co_t) BN-scale-folded weights
    # b_ref: (1, co_t) folded BN bias       o_ref: (tr, co_t)
    acc = jnp.dot(x_ref[...], w_ref[...], preferred_element_type=jnp.float32)
    o_ref[...] = jnp.maximum(acc + b_ref[...], 0.0).astype(o_ref.dtype)


def _tap_conv_bn_relu_kernel(x_ref, w_ref, b_ref, o_ref, *scratch_refs, wp, ks, cached):
    # x_ref: (rows_in, cin_p)   whole padded image of one batch element, flattened (resident)
    # w_ref: (ks*ks*cin_p, co_t) folded im2col weights   b_ref: (1, co_t) folded BN bias
    # o_ref: (L, co_t)          "wide" output rows for this (row-tile, co-tile)
    # scratch_refs: ((L, ks*ks*cin_p) VMEM slab cache,) iff cached (n_co > 1)
    L = o_ref.shape[0]
    base = pl.multiple_of(pl.program_id(1) * L, _SUB)

    def build_slab():
        # 9 sublane-contiguous tap slices -> one lane-concat im2col slab.
        patches = [x_ref[pl.ds(base + dy * wp + dx, L), :]
                   for dy in range(ks) for dx in range(ks)]
        return jnp.concatenate(patches, axis=-1)

    if cached:
        slab_ref, = scratch_refs

        @pl.when(pl.program_id(2) == 0)   # co is the innermost grid axis
        def _():
            slab_ref[...] = build_slab()

        cat = slab_ref[...]
    else:
        cat = build_slab()

    acc = jnp.dot(cat, w_ref[...], preferred_element_type=jnp.float32)
    o_ref[...] = jnp.maximum(acc + b_ref[...], 0.0).astype(o_ref.dtype)


# ---------------------------------------------------------------------------
# Wrapper
# ---------------------------------------------------------------------------
def conv_bn_relu(x_nchw, weight_oihw, gamma, beta, running_mean, running_var, *,
                 stride=1, padding=1, dilation=1, groups=1, eps=1e-5,
                 co_tile=None, mxu_dtype=jnp.float32):
    """Forward of ConvBNReLU (eval-mode BN). x_nchw: (N, Cin, H, W) -> (N, Cout, H, W)."""
    N, Cin, H, W = x_nchw.shape
    Cout, Cin_w, kh, kw = weight_oihw.shape
    assert kh == kw, "square kernels only"
    ks = int(kh)
    assert stride == 1 and dilation == 1 and groups == 1 and Cin_w == Cin, \
        "TODO(synk): only stride=1, dilation=1, groups=1 implemented"
    assert 2 * padding == ks - 1, "flattened-index mapping assumes 'same' conv geometry"

    out_dtype = x_nchw.dtype
    in_itemsize = jnp.dtype(mxu_dtype).itemsize
    vmem_limit = _vmem_budget_bytes()
    budget = int(vmem_limit * 0.8)

    # ---- fold eval-mode BN into weights / bias (item 7) ----
    scale = (gamma.astype(jnp.float32) /
             jnp.sqrt(running_var.astype(jnp.float32) + eps))
    bias = beta.astype(jnp.float32) - running_mean.astype(jnp.float32) * scale
    w_hwio = (jnp.transpose(weight_oihw, (2, 3, 1, 0)).astype(jnp.float32)
              * scale[None, None, None, :])                                   # (ks,ks,Cin,Cout)

    # ---- layout choice: compact-K for small-channel layers (item 9) ----
    use_compact = (ks * ks * Cin) <= 256
    if use_compact:
        K_real = ks * ks * Cin
        K_pad = _round_up(K_real, _LANE)
    else:
        cin_p = _round_up(Cin, _LANE)
        K_pad = ks * ks * cin_p

    # ---- Cout tiling (items 5, 6) ----
    if co_tile is not None:
        assert co_tile % _LANE == 0, "co_tile must be a multiple of 128 (lane-dense stores)"
        cout_p = _round_up(Cout, co_tile)
        co_t = int(co_tile)
    else:
        cout_p = _round_up(Cout, _LANE)
        if 2 * K_pad * cout_p * in_itemsize <= 6 * 1024 * 1024:
            co_t = cout_p            # whole folded weight slab resident -> n_co == 1
        elif cout_p % 256 == 0:
            co_t = 256               # fill the 2x256x256 MXU on v6e/v7x
        else:
            co_t = _LANE
    n_co = cout_p // co_t

    b_row = jnp.pad(bias, (0, cout_p - Cout)).reshape(1, cout_p)              # f32 (1, Cout_p)
    x_nhwc = jnp.transpose(x_nchw, (0, 2, 3, 1)).astype(jnp.float32)          # (N,H,W,Cin)

    if use_compact:
        # ========== compact-K GEMM path (blocked rows, no whole-image residency) ==========
        w_mat = jnp.pad(w_hwio.reshape(ks * ks * Cin, Cout),
                        ((0, K_pad - K_real), (0, cout_p - Cout))).astype(mxu_dtype)

        x_pad = jnp.pad(x_nhwc, ((0, 0), (padding, padding), (padding, padding), (0, 0)))
        patches = [x_pad[:, dy:dy + H, dx:dx + W, :]
                   for dy in range(ks) for dx in range(ks)]                   # (dy,dx,c) order
        slab = jnp.concatenate(patches, axis=-1).reshape(N, H * W, K_real)

        total_rows = H * W
        bytes_per_row = 2 * K_pad * in_itemsize + 2 * co_t * 4
        fixed = 2 * K_pad * co_t * in_itemsize + 8 * co_t * 4 + (1 << 20)
        tr = _pick_row_tile(total_rows, bytes_per_row, fixed, budget, need_split=(N == 1))
        r_pad = _round_up(total_rows, tr)
        slab = jnp.pad(slab, ((0, 0), (0, r_pad - total_rows),
                              (0, K_pad - K_real))).astype(mxu_dtype)

        out_flat = pl.pallas_call(
            _gemm_bn_relu_kernel,
            out_shape=jax.ShapeDtypeStruct((N, r_pad, cout_p), jnp.float32),
            grid_spec=pltpu.PrefetchScalarGridSpec(
                num_scalar_prefetch=0,
                grid=(N, r_pad // tr, n_co),
                in_specs=[
                    pl.BlockSpec((None, tr, K_pad), lambda n, r, c: (n, r, 0)),
                    pl.BlockSpec((K_pad, co_t), lambda n, r, c: (0, c)),
                    pl.BlockSpec((1, co_t), lambda n, r, c: (0, c)),
                ],
                out_specs=pl.BlockSpec((None, tr, co_t), lambda n, r, c: (n, r, c)),
            ),
            compiler_params=pltpu.CompilerParams(
                dimension_semantics=("parallel", "parallel", "parallel"),
                vmem_limit_bytes=int(vmem_limit),
            ),
        )(slab, w_mat, b_row)

        out = out_flat[:, :H * W, :Cout].reshape(N, H, W, Cout)
    else:
        # ========== in-kernel tap path (wide channels) ==========
        wp = _round_up(W + 2 * padding, _SUB)        # sublane-aligned row stride (item 8)
        hp = H + 2 * padding
        w_p = jnp.pad(w_hwio, ((0, 0), (0, 0), (0, cin_p - Cin), (0, cout_p - Cout)))
        w_mat = w_p.reshape(ks * ks * cin_p, cout_p).astype(mxu_dtype)

        x_pad = jnp.pad(x_nhwc, ((0, 0), (padding, padding),
                                 (padding, wp - W - padding), (0, cin_p - Cin)))
        x_flat = x_pad.reshape(N, hp * wp, cin_p)

        total_rows = H * wp                           # "wide" output rows
        bytes_per_row = 2 * ks * ks * cin_p * in_itemsize + 2 * co_t * 4
        rows_in_est = hp * wp + ks * wp
        fixed = (2 * rows_in_est * cin_p * in_itemsize
                 + 2 * ks * ks * cin_p * co_t * in_itemsize + (1 << 20))
        tr = _pick_row_tile(total_rows, bytes_per_row, fixed, budget, need_split=(N == 1))
        r_out_pad = _round_up(total_rows, tr)
        rows_in = _round_up(r_out_pad + (ks - 1) * wp + ks - 1, _SUB)
        x_flat = jnp.pad(x_flat, ((0, 0), (0, rows_in - hp * wp), (0, 0))).astype(mxu_dtype)

        cached = n_co > 1
        kern = functools.partial(_tap_conv_bn_relu_kernel, wp=wp, ks=ks, cached=cached)
        scratch = [pltpu.VMEM((tr, ks * ks * cin_p), mxu_dtype)] if cached else []
        co_sem = "arbitrary" if cached else "parallel"   # slab carry across co tiles

        out_flat = pl.pallas_call(
            kern,
            out_shape=jax.ShapeDtypeStruct((N, r_out_pad, cout_p), jnp.float32),
            grid_spec=pltpu.PrefetchScalarGridSpec(
                num_scalar_prefetch=0,
                grid=(N, r_out_pad // tr, n_co),
                in_specs=[
                    pl.BlockSpec((None, rows_in, cin_p), lambda n, r, c: (n, 0, 0)),
                    pl.BlockSpec((ks * ks * cin_p, co_t), lambda n, r, c: (0, c)),
                    pl.BlockSpec((1, co_t), lambda n, r, c: (0, c)),
                ],
                out_specs=pl.BlockSpec((None, tr, co_t), lambda n, r, c: (n, r, c)),
                scratch_shapes=scratch,
            ),
            compiler_params=pltpu.CompilerParams(
                dimension_semantics=("parallel", "parallel", co_sem),
                vmem_limit_bytes=int(vmem_limit),
            ),
        )(x_flat, w_mat, b_row)

        out = (out_flat[:, :H * wp, :]
               .reshape(N, H, wp, cout_p)[:, :, :W, :Cout])

    return jnp.transpose(out, (0, 3, 1, 2)).astype(out_dtype)                 # (N,Cout,H,W)


# ---------------------------------------------------------------------------
# Plain-JAX reference: conv2d + eval-mode BN + ReLU (NCHW)
# ---------------------------------------------------------------------------
def _reference(x_nchw, weight_oihw, gamma, beta, running_mean, running_var,
               *, padding=1, eps=1e-5):
    y = lax.conv_general_dilated(
        x_nchw, weight_oihw, window_strides=(1, 1),
        padding=((padding, padding), (padding, padding)),
        dimension_numbers=("NCHW", "OIHW", "NCHW"),
        precision=lax.Precision.HIGHEST)
    scale = (gamma / jnp.sqrt(running_var + eps)).reshape(1, -1, 1, 1)
    bias = (beta - running_mean * gamma / jnp.sqrt(running_var + eps)).reshape(1, -1, 1, 1)
    return jnp.maximum(y * scale + bias, 0.0)


if __name__ == "__main__":
    def make_case(key, n, cin, cout, h, w, ks=3):
        k_x, k_w, k_g, k_b, k_m, k_v = jax.random.split(key, 6)
        x = jax.random.normal(k_x, (n, cin, h, w), dtype=jnp.float32)
        wt = jax.random.normal(k_w, (cout, cin, ks, ks), dtype=jnp.float32) * 0.1
        gamma = 1.0 + 0.1 * jax.random.normal(k_g, (cout,), dtype=jnp.float32)
        beta = 0.1 * jax.random.normal(k_b, (cout,), dtype=jnp.float32)
        mean = 0.05 * jax.random.normal(k_m, (cout,), dtype=jnp.float32)
        var = jnp.abs(1.0 + 0.1 * jax.random.normal(k_v, (cout,), dtype=jnp.float32))
        return x, wt, gamma, beta, mean, var

    key = jax.random.PRNGKey(0)
    k1, k2 = jax.random.split(key)

    # 1) small-channel layer -> compact-K GEMM path (f32 MXU, strict tolerance)
    args1 = make_case(k1, 2, 4, 8, 16, 16)
    out1 = jax.block_until_ready(conv_bn_relu(*args1))
    ref1 = _reference(*args1)
    assert out1.shape == (2, 8, 16, 16)
    assert jnp.allclose(out1, ref1, atol=1e-4, rtol=1e-4), "compact path mismatch vs reference"

    # 2) wide-channel layer -> in-kernel tap path; co_tile=128 forces n_co=2 so the
    #    VMEM-cached im2col slab (built only at co==0) is exercised.
    args2 = make_case(k2, 1, 64, 192, 16, 16)
    out2 = jax.block_until_ready(conv_bn_relu(*args2, co_tile=128))
    ref2 = _reference(*args2)
    assert out2.shape == (1, 192, 16, 16)
    assert jnp.allclose(out2, ref2, atol=1e-4, rtol=1e-4), "tap path mismatch vs reference"

    # 3) bf16 MXU operands (f32 accumulation + f32 epilogue), looser tolerance
    out3 = jax.block_until_ready(conv_bn_relu(*args1, mxu_dtype=jnp.bfloat16))
    assert jnp.allclose(out3, ref1, atol=3e-2, rtol=3e-2), "bf16 MXU path mismatch vs reference"

    print("KERNEL_OK")
</pallas_src>

<mosaic_0001>
module attributes {stable_mosaic.version = 11 : i64} {
  func.func @_gemm_bn_relu_kernel(%arg0: i32, %arg1: i32, %arg2: i32, %arg3: memref<1x256x128xf32, #tpu.memory_space<vmem>>, %arg4: memref<128x128xf32, #tpu.memory_space<vmem>>, %arg5: memref<1x128xf32, #tpu.memory_space<vmem>>, %arg6: memref<1x256x128xf32, #tpu.memory_space<vmem>>) attributes {dimension_semantics = [#tpu.dimension_semantics<parallel>, #tpu.dimension_semantics<parallel>, #tpu.dimension_semantics<parallel>], iteration_bounds = array<i64: 2, 1, 1>, scalar_prefetch = 0 : i64, scratch_operands = 0 : i64, tpu.core_type = #tpu.core_type<tc>, window_params = [{transform_indices = @transform_0, window_bounds = array<i64: 1, 256, 128>}, {transform_indices = @transform_1, window_bounds = array<i64: 128, 128>}, {transform_indices = @transform_2, window_bounds = array<i64: 1, 128>}, {transform_indices = @transform_3, window_bounds = array<i64: 1, 256, 128>}]} {
    %c0 = arith.constant 0 : index
    %c0_0 = arith.constant 0 : index
    %c0_1 = arith.constant 0 : index
    %0 = vector.load %arg3[%c0, %c0_0, %c0_1] : memref<1x256x128xf32, #tpu.memory_space<vmem>>, vector<1x256x128xf32>
    %1 = vector.shape_cast %0 : vector<1x256x128xf32> to vector<256x128xf32>
    %c0_2 = arith.constant 0 : index
    %c0_3 = arith.constant 0 : index
    %2 = vector.load %arg4[%c0_2, %c0_3] : memref<128x128xf32, #tpu.memory_space<vmem>>, vector<128x128xf32>
    %cst = arith.constant dense<0.000000e+00> : vector<256x128xf32>
    %3 = tpu.matmul %1, %2, %cst {dimension_numbers = #tpu.dot_dimension_numbers<[1], [0], [0], [1], [0, 0, 1, 1], [], []>} : vector<256x128xf32>, vector<128x128xf32>, vector<256x128xf32> -> vector<256x128xf32>
    %c0_4 = arith.constant 0 : index
    %c0_5 = arith.constant 0 : index
    %4 = vector.load %arg5[%c0_4, %c0_5] : memref<1x128xf32, #tpu.memory_space<vmem>>, vector<1x128xf32>
    %5 = vector.broadcast %4 : vector<1x128xf32> to vector<256x128xf32>
    %6 = arith.addf %3, %5 : vector<256x128xf32>
    %cst_6 = arith.constant 0.000000e+00 : f32
    %7 = vector.broadcast %cst_6 : f32 to vector<256x128xf32>
    %8 = arith.maximumf %6, %7 : vector<256x128xf32>
    %c0_7 = arith.constant 0 : index
    %c0_8 = arith.constant 0 : index
    %c0_9 = arith.constant 0 : index
    %9 = vector.load %arg6[%c0_7, %c0_8, %c0_9] : memref<1x256x128xf32, #tpu.memory_space<vmem>>, vector<1x256x128xf32>
    %10 = vector.shape_cast %9 : vector<1x256x128xf32> to vector<256x128xf32>
    %11 = vector.shape_cast %8 : vector<256x128xf32> to vector<1x256x128xf32>
    tpu.vector_store %arg6[%c0_7, %c0_8, %c0_9], %11 {strides = array<i32>} : memref<1x256x128xf32, #tpu.memory_space<vmem>>, vector<1x256x128xf32>,
    return
  }
  func.func @transform_0(%arg0: i32, %arg1: i32, %arg2: i32) -> (i32, i32, i32) {
    %c0_i32 = arith.constant 0 : i32
    %c0_i32_0 = arith.constant 0 : i32
    return %arg0, %arg1, %c0_i32 : i32, i32, i32
  }
  func.func @transform_1(%arg0: i32, %arg1: i32, %arg2: i32) -> (i32, i32) {
    %c0_i32 = arith.constant 0 : i32
    %c0_i32_0 = arith.constant 0 : i32
    return %c0_i32, %arg2 : i32, i32
  }
  func.func @transform_2(%arg0: i32, %arg1: i32, %arg2: i32) -> (i32, i32) {
    %c0_i32 = arith.constant 0 : i32
    %c0_i32_0 = arith.constant 0 : i32
    return %c0_i32, %arg2 : i32, i32
  }
  func.func @transform_3(%arg0: i32, %arg1: i32, %arg2: i32) -> (i32, i32, i32) {
    %c0_i32 = arith.constant 0 : i32
    return %arg0, %arg1, %arg2 : i32, i32, i32
  }
}

</mosaic_0001>

<llo_original>
// kernel: tpu_custom_call.1
$region0: #{tpu_custom_call.1}
  #allocation0 [shape = 'u32[]', space=smem, size = 0x4, offset = 0x4, fixed_abs, tag = 'smem constant byte address 0x4 - core index']
  #allocation1 [shape = 'u32[72,128]{1,0:T(1,128)}', space=vmem, size = 0x9000, scoped, tag = 'internal scratch']
  %s0 = inlined_call_operand.hbm [shape: f32[2,256,128], index: 0, kind: input, shape index: {}]
  %s1 = inlined_call_operand.hbm [shape: f32[128,128], index: 1, kind: input, shape index: {}]
  %s2 = inlined_call_operand.vmem [shape: f32[1,128], index: 2, kind: input, shape index: {}]
  %s3 = inlined_call_operand.hbm [shape: f32[2,256,128], index: 3, kind: output, shape index: {}]
  %s4 = sld [smem:[#allocation0]]
  $region53: #{tpu_custom_call.1} parent=0
    _
  %s6 = ssub.s32 1, %s4
  %s7 = scalar_select 0, %s6, %s4
  $region1: #{tpu_custom_call.1} parent=0
    #allocation2 [shape = 'u8[262144]{0}', space=vmem, size = 0x40000, scoped, tag = 'input window, operand 0']
    #allocation3 [shape = 's32[2]{0}', space=sflag, size = 0x8, scoped, tag = 'scoped memory for tpu_custom_call.1']
    #allocation4 [shape = 's32[2]{0}', space=sflag, size = 0x8, scoped, tag = 'scoped memory for tpu_custom_call.1']
    #allocation5 [shape = 'u8[65536]{0}', space=vmem, size = 0x10000, scoped, tag = 'input window, operand 1, single buffered']
    #allocation6 [shape = 's32[1]{0}', space=sflag, size = 0x4, scoped, tag = 'scoped memory for tpu_custom_call.1']
    #allocation7 [shape = 'u8[262144]{0}', space=vmem, size = 0x40000, scoped, tag = 'output window, operand 0']
    %8 = vsyncpa [#allocation3], 0
    %s9 = scalar_lea.sflag [#allocation3], 1
    %10 = vsyncpa %s9, 0
    %11 = vsyncpa [#allocation6], 0
    %12 = vsyncpa [#allocation4], 0
    %s13 = scalar_lea.sflag [#allocation4], 1
    %14 = vsyncpa %s13, 0
    loop: start=0, step=1, limit=4
    $region2: #{tpu_custom_call.1} parent=1 // loop_pre_header
      _
    $region3: #{tpu_custom_call.1} parent=1 // loop_header
      %s16 = sphi 0, %s20
      %p17 = scmp.ge.s32.totalorder %s16, 4
      %s23 = sphi 0, %s42
      %s24 = sphi 0, %s38
      %s25 = sphi 0, %s34
      %s26 = sphi 0, %s23
      %s27 = sphi 0, %s24
      %s28 = sphi 0, %s25
      %s29 = sphi 0, %s26
      %s30 = sphi 0, %s27
      %s31 = sphi 0, %s28
      %s47 = sphi 0, %s49
      %s50 = sphi 0, %s47
      %s51 = sphi 0, %s50
      %s67 = sphi 0, %s51
      %s73 = sphi 0, %s75
      %s76 = sphi 0, %s73
      %s77 = sphi 0, %s76
      %s93 = sphi 0, %s77
      %s99 = sphi 0, %s101
      %s102 = sphi 0, %s99
      %s103 = sphi 0, %s102
      %s119 = sphi 0, %s103
      %s129 = sphi 0, %s131
      %s132 = sphi 0, %s129
      %s133 = sphi 0, %s132
      %s149 = sphi 0, %s133
    $region4: #{tpu_custom_call.1} parent=1 // loop_header_branch
      %19 = sbr.rel (%p17) target = $region8
    $region5: #{tpu_custom_call.1} parent=1 // loop_body
      %s21 = ssub.s32 %s16, 1
      %s22 = ssub.s32 %s16, 2
      %s32 = sadd.s32 1, %s25
      %p33 = scmp.ge.s32.totalorder %s32, 1
      %s34 = scalar_select %p33, 0, %s32
      %s35 = sadd.s32 1, %s24
      %s36 = scalar_select %p33, %s35, %s24
      %p37 = scmp.ge.s32.totalorder %s36, 1
      %s38 = scalar_select %p37, 0, %s36
      %s39 = sadd.s32 1, %s23
      %s40 = scalar_select %p37, %s39, %s23
      %p41 = scmp.ge.s32.totalorder %s40, 2
      %s42 = scalar_select %p41, 0, %s40
      %s43 = ssub.s32 %s23, %s42
      %s44 = ssub.s32 %s24, %s38
      %s45 = sor.u32 %s43, %s44
      %p46 = scmp.eq.s32.totalorder %s45, 0
      %s48 = sadd.s32 %s47, 1
      %s49 = scalar_select %p46, %s47, %s48
      %p52 = pneg %p46
      %p53 = scmp.eq.s32.totalorder %s16, 1
      %p54 = por %p52, %p53
      %p55 = scmp.ne.s32.totalorder %s47, %s50
      %p56 = scmp.eq.s32.totalorder %s16, 0
      %p57 = por %p55, %p56
      %p58 = scmp.ne.s32.totalorder %s47, %s50
      %p59 = scmp.eq.s32.totalorder %s21, 1
      %p60 = por %p58, %p59
      %p61 = scmp.ne.s32.totalorder %s50, %s51
      %p62 = scmp.eq.s32.totalorder %s21, 0
      %p63 = por %p61, %p62
      %p64 = scmp.ne.s32.totalorder %s50, %s51
      %p65 = scmp.eq.s32.totalorder %s22, 1
      %p66 = por %p64, %p65
      %p68 = scmp.ne.s32.totalorder %s51, %s67
      %p69 = scmp.eq.s32.totalorder %s22, 0
      %p70 = por %p68, %p69
      %s71 = ssub.s32 %s25, %s34
      %p72 = scmp.eq.s32.totalorder %s71, 0
      %s74 = sadd.s32 %s73, 1
      %s75 = scalar_select %p72, %s73, %s74
      %p78 = pneg %p72
      %p79 = scmp.eq.s32.totalorder %s16, 1
      %p80 = por %p78, %p79
      %p81 = scmp.ne.s32.totalorder %s73, %s76
      %p82 = scmp.eq.s32.totalorder %s16, 0
      %p83 = por %p81, %p82
      %p84 = scmp.ne.s32.totalorder %s73, %s76
      %p85 = scmp.eq.s32.totalorder %s21, 1
      %p86 = por %p84, %p85
      %p87 = scmp.ne.s32.totalorder %s76, %s77
      %p88 = scmp.eq.s32.totalorder %s21, 0
      %p89 = por %p87, %p88
      %p90 = scmp.ne.s32.totalorder %s76, %s77
      %p91 = scmp.eq.s32.totalorder %s22, 1
      %p92 = por %p90, %p91
      %p94 = scmp.ne.s32.totalorder %s77, %s93
      %p95 = scmp.eq.s32.totalorder %s22, 0
      %p96 = por %p94, %p95
      %s97 = ssub.s32 %s25, %s34
      %p98 = scmp.eq.s32.totalorder %s97, 0
      %s100 = sadd.s32 %s99, 1
      %s101 = scalar_select %p98, %s99, %s100
      %p104 = pneg %p98
      %p105 = scmp.eq.s32.totalorder %s16, 1
      %p106 = por %p104, %p105
      %p107 = scmp.ne.s32.totalorder %s99, %s102
      %p108 = scmp.eq.s32.totalorder %s16, 0
      %p109 = por %p107, %p108
      %p110 = scmp.ne.s32.totalorder %s99, %s102
      %p111 = scmp.eq.s32.totalorder %s21, 1
      %p112 = por %p110, %p111
      %p113 = scmp.ne.s32.totalorder %s102, %s103
      %p114 = scmp.eq.s32.totalorder %s21, 0
      %p115 = por %p113, %p114
      %p116 = scmp.ne.s32.totalorder %s102, %s103
      %p117 = scmp.eq.s32.totalorder %s22, 1
      %p118 = por %p116, %p117
      %p120 = scmp.ne.s32.totalorder %s103, %s119
      %p121 = scmp.eq.s32.totalorder %s22, 0
      %p122 = por %p120, %p121
      %s123 = ssub.s32 %s23, %s42
      %s124 = ssub.s32 %s24, %s38
      %s125 = sor.u32 %s123, %s124
      %s126 = ssub.s32 %s25, %s34
      %s127 = sor.u32 %s125, %s126
      %p128 = scmp.eq.s32.totalorder %s127, 0
      %s130 = sadd.s32 %s129, 1
      %s131 = scalar_select %p128, %s129, %s130
      %p134 = pneg %p128
      %p135 = scmp.eq.s32.totalorder %s16, 1
      %p136 = por %p134, %p135
      %p137 = scmp.ne.s32.totalorder %s129, %s132
      %p138 = scmp.eq.s32.totalorder %s16, 0
      %p139 = por %p137, %p138
      %p140 = scmp.ne.s32.totalorder %s129, %s132
      %p141 = scmp.eq.s32.totalorder %s21, 1
      %p142 = por %p140, %p141
      %p143 = scmp.ne.s32.totalorder %s132, %s133
      %p144 = scmp.eq.s32.totalorder %s21, 0
      %p145 = por %p143, %p144
      %p146 = scmp.ne.s32.totalorder %s132, %s133
      %p147 = scmp.eq.s32.totalorder %s22, 1
      %p148 = por %p146, %p147
      %p150 = scmp.ne.s32.totalorder %s133, %s149
      %p151 = scmp.eq.s32.totalorder %s22, 0
      %p152 = por %p150, %p151
      %p153 = scmp.le.s32.totalorder 1, %s16
      %p154 = scmp.lt.s32.totalorder %s16, 3
      %p155 = pnand %p153, %p154
      %p156 = pneg %p155
      // Predicated region
      $region9: #{tpu_custom_call.1} parent=5 // pred_check
        _
      $region10: #{tpu_custom_call.1} parent=5 // pred_check_branch
        %158 = sbr.rel (%p155) target = $region12
      $region11: #{tpu_custom_call.1} parent=5 // pred_region
        %s159 = ssub.s32 %s16, 1
        // Predicated region
        $region13: #{tpu_custom_call.1} parent=11 // pred_check
          %p160 = pneg %p89
        $region14: #{tpu_custom_call.1} parent=11 // pred_check_branch
          %162 = sbr.rel (%p160) target = $region16
        $region15: #{tpu_custom_call.1} parent=11 // pred_region
          %164 = vsyncadd [#allocation6], 0
          %s165 = smul.addr %s28, 8
          %s166 = scalar_lea.hbm %s1, %s165
          %s167 = sshll.u32 %s166, 4
          %s168 = int_to_ptr.hbm [resolvable:$true] %s167
          %s169 = sshll.u32 [#allocation5], 4
          %s170 = int_to_ptr.vmem [resolvable:$true] %s169
          %175 = dma.hbm_to_vmem [thread:$0]  %s168, 2048, %s170, [#allocation6], 128, 128, 8
        $region16: #{tpu_custom_call.1} parent=11 // pred_fallthru
          _
        // Predicated region
        $region17: #{tpu_custom_call.1} parent=11 // pred_check
          %p176 = pneg %p115
        $region18: #{tpu_custom_call.1} parent=11 // pred_check_branch
          %178 = sbr.rel (%p176) target = $region20
        $region19: #{tpu_custom_call.1} parent=11 // pred_region
          %p179 = scmp.lt.s32.totalorder %s28, 0
          %s180 = scalar_select %p179, %s28, 0
          %s181 = scalar_lea.vmem %s2, %s180
        $region20: #{tpu_custom_call.1} parent=11 // pred_fallthru
          _
      $region12: #{tpu_custom_call.1} parent=5 // pred_fallthru
        _
      %p182 = scmp.lt.s32.totalorder %s16, 2
      // Predicated region
      $region21: #{tpu_custom_call.1} parent=5 // pred_check
        %p183 = pneg %p182
      $region22: #{tpu_custom_call.1} parent=5 // pred_check_branch
        %185 = sbr.rel (%p183) target = $region24
      $region23: #{tpu_custom_call.1} parent=5 // pred_region
        // Predicated region
        $region25: #{tpu_custom_call.1} parent=23 // pred_check
          %p186 = pneg %p57
        $region26: #{tpu_custom_call.1} parent=23 // pred_check_branch
          %188 = sbr.rel (%p186) target = $region28
        $region27: #{tpu_custom_call.1} parent=23 // pred_region
          %s189 = sand.u32 %s47, 1
          %s190 = scalar_lea.sflag [#allocation3], %s189
          %s191 = sand.u32 %s47, 1
          %s192 = smul.addr %s191, 256
          %s193 = scalar_lea.vmem [#allocation2], %s192
          %s194 = smul.u32 32, %s24
          %196 = vsyncadd %s190, 0
          %s197 = smul.addr %s23, 32
          %s198 = sadd.s32 %s194, %s197
          %s199 = smul.addr %s198, 8
          %s200 = scalar_lea.hbm %s0, %s199
          %s201 = sshll.u32 %s200, 4
          %s202 = int_to_ptr.hbm [resolvable:$true] %s201
          %s203 = sshll.u32 %s193, 4
          %s204 = int_to_ptr.vmem [resolvable:$true] %s203
          %209 = dma.hbm_to_vmem [thread:$0]  %s202, 4096, %s204, %s190, 128, 128, 8
        $region28: #{tpu_custom_call.1} parent=23 // pred_fallthru
          _
      $region24: #{tpu_custom_call.1} parent=5 // pred_fallthru
        _
      %p210 = scmp.le.s32.totalorder 1, %s16
      %p211 = scmp.lt.s32.totalorder %s16, 3
      %p212 = pnand %p210, %p211
      %p213 = pneg %p212
      // Predicated region
      $region29: #{tpu_custom_call.1} parent=5 // pred_check
        _
      $region30: #{tpu_custom_call.1} parent=5 // pred_check_branch
        %215 = sbr.rel (%p212) target = $region32
      $region31: #{tpu_custom_call.1} parent=5 // pred_region
        %s216 = ssub.s32 %s16, 1
        %s217 = sand.u32 %s50, 1
        %s218 = scalar_lea.sflag [#allocation3], %s217
        %s219 = sand.u32 %s50, 1
        %s220 = smul.addr %s219, 256
        %s221 = scalar_lea.vmem [#allocation2], %s220
        // Predicated region
        $region33: #{tpu_custom_call.1} parent=31 // pred_check
          %p222 = pneg %p63
        $region34: #{tpu_custom_call.1} parent=31 // pred_check_branch
          %224 = sbr.rel (%p222) target = $region36
        $region35: #{tpu_custom_call.1} parent=31 // pred_region
          %226 = dma.done %s218, 4096
        $region36: #{tpu_custom_call.1} parent=31 // pred_fallthru
          _
        // Predicated region
        $region37: #{tpu_custom_call.1} parent=31 // pred_check
          %p227 = pneg %p89
        $region38: #{tpu_custom_call.1} parent=31 // pred_check_branch
          %229 = sbr.rel (%p227) target = $region40
        $region39: #{tpu_custom_call.1} parent=31 // pred_region
          %231 = dma.done [#allocation6], 2048
        $region40: #{tpu_custom_call.1} parent=31 // pred_fallthru
          _
        %s232 = sand.u32 %s50, 1
        %s233 = scalar_lea.sflag [#allocation3], %s232
        %s234 = sand.u32 %s50, 1
        %s235 = smul.addr %s234, 256
        %s236 = scalar_lea.vmem [#allocation2], %s235
        %p237 = pneg %p63
        %p238 = pneg %p60
        %p239 = pneg %p89
        %p240 = pneg %p86
        %p241 = scmp.lt.s32.totalorder %s28, 0
        %s242 = scalar_select %p241, %s28, 0
        %s243 = scalar_lea.vmem %s2, %s242
        %p244 = pneg %p115
        %p245 = pneg %p112
        %p246 = pneg %p145
        %p247 = pneg %p142
        %s248 = sand.u32 %s132, 1
        %s249 = scalar_lea.sflag [#allocation4], %s248
        %s250 = sand.u32 %s132, 1
        %s251 = smul.addr %s250, 256
        %s252 = scalar_lea.vmem [#allocation7], %s251
        %s253 = smul.u32 32, %s27
        %p254 = scmp.lt.s32.totalorder %s28, 0
        %s255 = scalar_select %p254, %s28, 0
        %s256 = scalar_lea.vmem %s2, %s255
        %s257 = smul.u32 32, %s27
        %v258 = vld [vmem:[%s221] sm:$0xff]
        %v259 = vld [vmem:[%s221 + $0x8] sm:$0xff]
        %v260 = vld [vmem:[%s221 + $0x10] sm:$0xff]
        %v261 = vld [vmem:[%s221 + $0x18] sm:$0xff]
        %v262 = vld [vmem:[%s221 + $0x20] sm:$0xff]
        %v263 = vld [vmem:[%s221 + $0x28] sm:$0xff]
        %v264 = vld [vmem:[%s221 + $0x30] sm:$0xff]
        %v265 = vld [vmem:[%s221 + $0x38] sm:$0xff]
        %v266 = vld [vmem:[%s221 + $0x40] sm:$0xff]
        %v267 = vld [vmem:[%s221 + $0x48] sm:$0xff]
        %v268 = vld [vmem:[%s221 + $0x50] sm:$0xff]
        %v269 = vld [vmem:[%s221 + $0x58] sm:$0xff]
        %v270 = vld [vmem:[%s221 + $0x60] sm:$0xff]
        %v271 = vld [vmem:[%s221 + $0x68] sm:$0xff]
        %v272 = vld [vmem:[%s221 + $0x70] sm:$0xff]
        %v273 = vld [vmem:[%s221 + $0x78] sm:$0xff]
        %v274 = vld [vmem:[%s221 + $0x80] sm:$0xff]
        %v275 = vld [vmem:[%s221 + $0x88] sm:$0xff]
        %v276 = vld [vmem:[%s221 + $0x90] sm:$0xff]
        %v277 = vld [vmem:[%s221 + $0x98] sm:$0xff]
        %v278 = vld [vmem:[%s221 + $0xa0] sm:$0xff]
        %v279 = vld [vmem:[%s221 + $0xa8] sm:$0xff]
        %v280 = vld [vmem:[%s221 + $0xb0] sm:$0xff]
        %v281 = vld [vmem:[%s221 + $0xb8] sm:$0xff]
        %v282 = vld [vmem:[%s221 + $0xc0] sm:$0xff]
        %v283 = vld [vmem:[%s221 + $0xc8] sm:$0xff]
        %v284 = vld [vmem:[%s221 + $0xd0] sm:$0xff]
        %v285 = vld [vmem:[%s221 + $0xd8] sm:$0xff]
        %v286 = vld [vmem:[%s221 + $0xe0] sm:$0xff]
        %v287 = vld [vmem:[%s221 + $0xe8] sm:$0xff]
        %v288 = vld [vmem:[%s221 + $0xf0] sm:$0xff]
        %v289 = vld [vmem:[%s221 + $0xf8] sm:$0xff]
        %v290 = vld [vmem:[#allocation5] sm:$0xff]
        %v291 = vld [vmem:[#allocation5 + $0x8] sm:$0xff]
        %v292 = vld [vmem:[#allocation5 + $0x10] sm:$0xff]
        %v293 = vld [vmem:[#allocation5 + $0x18] sm:$0xff]
        %v294 = vld [vmem:[#allocation5 + $0x20] sm:$0xff]
        %v295 = vld [vmem:[#allocation5 + $0x28] sm:$0xff]
        %v296 = vld [vmem:[#allocation5 + $0x30] sm:$0xff]
        %v297 = vld [vmem:[#allocation5 + $0x38] sm:$0xff]
        %v298 = vld [vmem:[#allocation5 + $0x40] sm:$0xff]
        %v299 = vld [vmem:[#allocation5 + $0x48] sm:$0xff]
        %v300 = vld [vmem:[#allocation5 + $0x50] sm:$0xff]
        %v301 = vld [vmem:[#allocation5 + $0x58] sm:$0xff]
        %v302 = vld [vmem:[#allocation5 + $0x60] sm:$0xff]
        %v303 = vld [vmem:[#allocation5 + $0x68] sm:$0xff]
        %v304 = vld [vmem:[#allocation5 + $0x70] sm:$0xff]
        %v305 = vld [vmem:[#allocation5 + $0x78] sm:$0xff]
        %v306 = vld [vmem:[%s256] sm:$0x1]
        %v308 = vperm.slane %v306, 0
        %310 = vmatpush.msra.mxu0 %v305
        %311 = vmatpush.msra.mxu0 %v304
        %312 = vmatpush.msra.mxu0 %v303
        %313 = vmatpush.msra.mxu0 %v302
        %314 = vmatpush.msra.mxu0 %v301
        %315 = vmatpush.msra.mxu0 %v300
        %316 = vmatpush.msra.mxu0 %v299
        %317 = vmatpush.msra.mxu0 %v298
        %318 = vmatpush.msra.mxu0 %v297
        %319 = vmatpush.msra.mxu0 %v296
        %320 = vmatpush.msra.mxu0 %v295
        %321 = vmatpush.msra.mxu0 %v294
        %322 = vmatpush.msra.mxu0 %v293
        %323 = vmatpush.msra.mxu0 %v292
        %324 = vmatpush.msra.mxu0 %v291
        %325 = vmatpush.msra.mxu0 %v290
        %326 = vmatmul.f32.gmra.mxu0 %v258
        %v327 = vpop.f32.mrf.mxu0
        %v328 = vadd.f32 %v308, %v327
        %329 = vmatmul.f32.gmra.mxu0 %v259
        %v330 = vpop.f32.mrf.mxu0
        %v331 = vadd.f32 %v308, %v330
        %332 = vmatmul.f32.gmra.mxu0 %v260
        %v333 = vpop.f32.mrf.mxu0
        %v334 = vadd.f32 %v308, %v333
        %335 = vmatmul.f32.gmra.mxu0 %v261
        %v336 = vpop.f32.mrf.mxu0
        %v337 = vadd.f32 %v308, %v336
        %338 = vmatmul.f32.gmra.mxu0 %v262
        %v339 = vpop.f32.mrf.mxu0
        %v340 = vadd.f32 %v308, %v339
        %341 = vmatmul.f32.gmra.mxu0 %v263
        %v342 = vpop.f32.mrf.mxu0
        %v343 = vadd.f32 %v308, %v342
        %344 = vmatmul.f32.gmra.mxu0 %v264
        %v345 = vpop.f32.mrf.mxu0
        %v346 = vadd.f32 %v308, %v345
        %347 = vmatmul.f32.gmra.mxu0 %v265
        %v348 = vpop.f32.mrf.mxu0
        %v349 = vadd.f32 %v308, %v348
        %350 = vmatmul.f32.gmra.mxu0 %v266
        %v351 = vpop.f32.mrf.mxu0
        %v352 = vadd.f32 %v308, %v351
        %353 = vmatmul.f32.gmra.mxu0 %v267
        %v354 = vpop.f32.mrf.mxu0
        %v355 = vadd.f32 %v308, %v354
        %356 = vmatmul.f32.gmra.mxu0 %v268
        %v357 = vpop.f32.mrf.mxu0
        %v358 = vadd.f32 %v308, %v357
        %359 = vmatmul.f32.gmra.mxu0 %v269
        %v360 = vpop.f32.mrf.mxu0
        %v361 = vadd.f32 %v308, %v360
        %362 = vmatmul.f32.gmra.mxu0 %v270
        %v363 = vpop.f32.mrf.mxu0
        %v364 = vadd.f32 %v308, %v363
        %365 = vmatmul.f32.gmra.mxu0 %v271
        %v366 = vpop.f32.mrf.mxu0
        %v367 = vadd.f32 %v308, %v366
        %368 = vmatmul.f32.gmra.mxu0 %v272
        %v369 = vpop.f32.mrf.mxu0
        %v370 = vadd.f32 %v308, %v369
        %371 = vmatmul.f32.gmra.mxu0 %v273
        %v372 = vpop.f32.mrf.mxu0
        %v373 = vadd.f32 %v308, %v372
        %374 = vmatmul.f32.gmra.mxu0 %v274
        %v375 = vpop.f32.mrf.mxu0
        %v376 = vadd.f32 %v308, %v375
        %377 = vmatmul.f32.gmra.mxu0 %v275
        %v378 = vpop.f32.mrf.mxu0
        %v379 = vadd.f32 %v308, %v378
        %380 = vmatmul.f32.gmra.mxu0 %v276
        %v381 = vpop.f32.mrf.mxu0
        %v382 = vadd.f32 %v308, %v381
        %383 = vmatmul.f32.gmra.mxu0 %v277
        %v384 = vpop.f32.mrf.mxu0
        %v385 = vadd.f32 %v308, %v384
        %386 = vmatmul.f32.gmra.mxu0 %v278
        %v387 = vpop.f32.mrf.mxu0
        %v388 = vadd.f32 %v308, %v387
        %389 = vmatmul.f32.gmra.mxu0 %v279
        %v390 = vpop.f32.mrf.mxu0
        %v391 = vadd.f32 %v308, %v390
        %392 = vmatmul.f32.gmra.mxu0 %v280
        %v393 = vpop.f32.mrf.mxu0
        %v394 = vadd.f32 %v308, %v393
        %395 = vmatmul.f32.gmra.mxu0 %v281
        %v396 = vpop.f32.mrf.mxu0
        %v397 = vadd.f32 %v308, %v396
        %398 = vmatmul.f32.gmra.mxu0 %v282
        %v399 = vpop.f32.mrf.mxu0
        %v400 = vadd.f32 %v308, %v399
        %401 = vmatmul.f32.gmra.mxu0 %v283
        %v402 = vpop.f32.mrf.mxu0
        %v403 = vadd.f32 %v308, %v402
        %404 = vmatmul.f32.gmra.mxu0 %v284
        %v405 = vpop.f32.mrf.mxu0
        %v406 = vadd.f32 %v308, %v405
        %407 = vmatmul.f32.gmra.mxu0 %v285
        %v408 = vpop.f32.mrf.mxu0
        %v409 = vadd.f32 %v308, %v408
        %410 = vmatmul.f32.gmra.mxu0 %v286
        %v411 = vpop.f32.mrf.mxu0
        %v412 = vadd.f32 %v308, %v411
        %413 = vmatmul.f32.gmra.mxu0 %v287
        %v414 = vpop.f32.mrf.mxu0
        %v415 = vadd.f32 %v308, %v414
        %416 = vmatmul.f32.gmra.mxu0 %v288
        %v417 = vpop.f32.mrf.mxu0
        %v418 = vadd.f32 %v308, %v417
        %419 = vmatmul.f32.gmra.mxu0 %v289
        %v420 = vpop.f32.mrf.mxu0
        %v421 = vadd.f32 %v308, %v420
        %422 = vdwg.mxu0
        %v423 = vmax.f32 %v328, 0.0
        %v424 = vmax.f32 %v331, 0.0
        %v425 = vmax.f32 %v334, 0.0
        %v426 = vmax.f32 %v337, 0.0
        %v427 = vmax.f32 %v340, 0.0
        %v428 = vmax.f32 %v343, 0.0
        %v429 = vmax.f32 %v346, 0.0
        %v430 = vmax.f32 %v349, 0.0
        %v431 = vmax.f32 %v352, 0.0
        %v432 = vmax.f32 %v355, 0.0
        %v433 = vmax.f32 %v358, 0.0
        %v434 = vmax.f32 %v361, 0.0
        %v435 = vmax.f32 %v364, 0.0
        %v436 = vmax.f32 %v367, 0.0
        %v437 = vmax.f32 %v370, 0.0
        %v438 = vmax.f32 %v373, 0.0
        %v439 = vmax.f32 %v376, 0.0
        %v440 = vmax.f32 %v379, 0.0
        %v441 = vmax.f32 %v382, 0.0
        %v442 = vmax.f32 %v385, 0.0
        %v443 = vmax.f32 %v388, 0.0
        %v444 = vmax.f32 %v391, 0.0
        %v445 = vmax.f32 %v394, 0.0
        %v446 = vmax.f32 %v397, 0.0
        %v447 = vmax.f32 %v400, 0.0
        %v448 = vmax.f32 %v403, 0.0
        %v449 = vmax.f32 %v406, 0.0
        %v450 = vmax.f32 %v409, 0.0
        %v451 = vmax.f32 %v412, 0.0
        %v452 = vmax.f32 %v415, 0.0
        %v453 = vmax.f32 %v418, 0.0
        %v454 = vmax.f32 %v421, 0.0
        %455 = vst [vmem:[%s252] sm:$0xff] %v423
        %456 = vst [vmem:[%s252 + $0x8] sm:$0xff] %v424
        %457 = vst [vmem:[%s252 + $0x10] sm:$0xff] %v425
        %458 = vst [vmem:[%s252 + $0x18] sm:$0xff] %v426
        %459 = vst [vmem:[%s252 + $0x20] sm:$0xff] %v427
        %460 = vst [vmem:[%s252 + $0x28] sm:$0xff] %v428
        %461 = vst [vmem:[%s252 + $0x30] sm:$0xff] %v429
        %462 = vst [vmem:[%s252 + $0x38] sm:$0xff] %v430
        %463 = vst [vmem:[%s252 + $0x40] sm:$0xff] %v431
        %464 = vst [vmem:[%s252 + $0x48] sm:$0xff] %v432
        %465 = vst [vmem:[%s252 + $0x50] sm:$0xff] %v433
        %466 = vst [vmem:[%s252 + $0x58] sm:$0xff] %v434
        %467 = vst [vmem:[%s252 + $0x60] sm:$0xff] %v435
        %468 = vst [vmem:[%s252 + $0x68] sm:$0xff] %v436
        %469 = vst [vmem:[%s252 + $0x70] sm:$0xff] %v437
        %470 = vst [vmem:[%s252 + $0x78] sm:$0xff] %v438
        %471 = vst [vmem:[%s252 + $0x80] sm:$0xff] %v439
        %472 = vst [vmem:[%s252 + $0x88] sm:$0xff] %v440
        %473 = vst [vmem:[%s252 + $0x90] sm:$0xff] %v441
        %474 = vst [vmem:[%s252 + $0x98] sm:$0xff] %v442
        %475 = vst [vmem:[%s252 + $0xa0] sm:$0xff] %v443
        %476 = vst [vmem:[%s252 + $0xa8] sm:$0xff] %v444
        %477 = vst [vmem:[%s252 + $0xb0] sm:$0xff] %v445
        %478 = vst [vmem:[%s252 + $0xb8] sm:$0xff] %v446
        %479 = vst [vmem:[%s252 + $0xc0] sm:$0xff] %v447
        %480 = vst [vmem:[%s252 + $0xc8] sm:$0xff] %v448
        %481 = vst [vmem:[%s252 + $0xd0] sm:$0xff] %v449
        %482 = vst [vmem:[%s252 + $0xd8] sm:$0xff] %v450
        %483 = vst [vmem:[%s252 + $0xe0] sm:$0xff] %v451
        %484 = vst [vmem:[%s252 + $0xe8] sm:$0xff] %v452
        %485 = vst [vmem:[%s252 + $0xf0] sm:$0xff] %v453
        %486 = vst [vmem:[%s252 + $0xf8] sm:$0xff] %v454
        %s487 = sand.u32 %s132, 1
        %s488 = scalar_lea.sflag [#allocation4], %s487
        %s489 = sand.u32 %s132, 1
        %s490 = smul.addr %s489, 256
        %s491 = scalar_lea.vmem [#allocation7], %s490
        // Predicated region
        $region41: #{tpu_custom_call.1} parent=31 // pred_check
          %p492 = pneg %p142
        $region42: #{tpu_custom_call.1} parent=31 // pred_check_branch
          %494 = sbr.rel (%p492) target = $region44
        $region43: #{tpu_custom_call.1} parent=31 // pred_region
          %s495 = smul.u32 32, %s27
          %497 = vsyncadd %s488, 0
          %s498 = sadd.s32 %s28, %s495
          %s499 = smul.addr %s26, 32
          %s500 = sadd.s32 %s498, %s499
          %s501 = smul.addr %s500, 8
          %s502 = scalar_lea.hbm %s3, %s501
          %s503 = sshll.u32 %s491, 4
          %s504 = int_to_ptr.vmem [resolvable:$true] %s503
          %s505 = sshll.u32 %s502, 4
          %s506 = int_to_ptr.hbm [resolvable:$true] %s505
          %511 = dma.vmem_to_hbm [thread:$0]  %s504, 4096, %s506, %s488, 128, 128, 8
        $region44: #{tpu_custom_call.1} parent=31 // pred_fallthru
          _
      $region32: #{tpu_custom_call.1} parent=5 // pred_fallthru
        _
      %p512 = scmp.le.s32.totalorder 2, %s16
      // Predicated region
      $region45: #{tpu_custom_call.1} parent=5 // pred_check
        %p513 = pneg %p512
      $region46: #{tpu_custom_call.1} parent=5 // pred_check_branch
        %515 = sbr.rel (%p513) target = $region48
      $region47: #{tpu_custom_call.1} parent=5 // pred_region
        %s516 = ssub.s32 %s16, 2
        // Predicated region
        $region49: #{tpu_custom_call.1} parent=47 // pred_check
          %p517 = pneg %p148
        $region50: #{tpu_custom_call.1} parent=47 // pred_check_branch
          %519 = sbr.rel (%p517) target = $region52
        $region51: #{tpu_custom_call.1} parent=47 // pred_region
          %s520 = sand.u32 %s133, 1
          %s521 = scalar_lea.sflag [#allocation4], %s520
          %s522 = sand.u32 %s133, 1
          %s523 = smul.addr %s522, 256
          %s524 = scalar_lea.vmem [#allocation7], %s523
          %526 = dma.done %s521, 4096
        $region52: #{tpu_custom_call.1} parent=47 // pred_fallthru
          _
      $region48: #{tpu_custom_call.1} parent=5 // pred_fallthru
        _
    $region6: #{tpu_custom_call.1} parent=1 // loop_footer
      %s20 = sadd.s32 1, %s16
    $region7: #{tpu_custom_call.1} parent=1 // loop_footer_branch
      %15 = sbr.rel target = $region3
    $region8: #{tpu_custom_call.1} parent=1 // loop_exit
      _
    %527 = vsyncpa [#allocation3], 1
    %s528 = scalar_lea.sflag [#allocation3], 1
    %529 = vsyncpa %s528, 1
    %530 = vsyncpa [#allocation6], 1
    %531 = vsyncpa [#allocation4], 1
    %s532 = scalar_lea.sflag [#allocation4], 1
    %533 = vsyncpa %s532, 1

</llo_original>
